<compile_context>
chip_gen: v6e
topology: v6e:2x2x1
jax: 0.10.0
libtpu: 0.0.40
codegen_flags: <defaults>
</compile_context>

<pallas_src>
import functools

import jax
import jax.numpy as jnp
from jax import lax
from jax.experimental import pallas as pl
from jax.experimental.pallas import tpu as pltpu


def _round_up(x, m):
    return (x + m - 1) // m * m


# -----------------------------------------------------------------------------
# Kernel 1: farthest point sampling (sublane-packed, single reduce per step)
# -----------------------------------------------------------------------------
def _fps_kernel(pts_ref, idx_ref, *, n_valid):
    # pts_ref: (3, 8, Nc) f32 VMEM -- flat point i lives at (i // Nc, i % Nc)
    # idx_ref: (S,)       i32 SMEM -- sampled indices (output)
    _, _, nc = pts_ref.shape
    n_pad = 8 * nc
    S = idx_ref.shape[0]
    # Enough index bits for every (possibly padded) flat position.
    idx_bits = max((n_pad - 1).bit_length(), 1)
    imask = (1 << idx_bits) - 1
    clear = ~imask                                            # python int, sign-extends

    x = pts_ref[0]                                            # (8, Nc), hoisted loads
    y = pts_ref[1]
    z = pts_ref[2]
    sub = lax.broadcasted_iota(jnp.int32, (8, nc), 0)
    lanep = lax.broadcasted_iota(jnp.int32, (8, nc), 1)
    flat = sub * nc + lanep                                   # flat point index
    valid = flat < n_valid
    # Padded entries carry min-distance 0 so they can never become the farthest
    # point (ties break toward the smallest flat index, which is a real point).
    mind0 = jnp.where(valid, jnp.float32(1e10), jnp.float32(0.0))

    def body(i, carry):
        mind, far = carry
        idx_ref[i] = far
        # Centroid fetch: masked cross-lane reduce from the same VMEM slab
        # (exactly one element matches), so no second copy of the cloud.
        sel = flat == far
        cx = jnp.sum(jnp.where(sel, x, 0.0))
        cy = jnp.sum(jnp.where(sel, y, 0.0))
        cz = jnp.sum(jnp.where(sel, z, 0.0))
        dx = x - cx
        dy = y - cy
        dz = z - cz
        d = dx * dx + dy * dy + dz * dz                       # (8, Nc), all sublanes busy
        mind = jnp.minimum(mind, d)
        # Single max-reduce for (max, argmax): non-negative f32 bitcasts to an
        # order-preserving int32; low idx_bits carry the inverted index so ties
        # break toward the smallest index.
        # TODO(synk): clearing the low idx_bits mantissa bits makes distances
        # that differ only below 2^-(23-idx_bits) relative count as ties --
        # harmless for the FPS heuristic but not bit-identical to torch.
        packed = (pltpu.bitcast(mind, jnp.int32) & clear) | (imask - flat)
        best = jnp.max(packed)
        nxt = (imask - (best & imask)).astype(jnp.int32)
        return mind, nxt

    # TODO(synk): torch farthest_point_sample seeds from a random start index;
    # we deterministically start from point 0.
    lax.fori_loop(0, S, body, (mind0, jnp.int32(0)))


def farthest_point_sample(points, num_samples):
    pts = points.astype(jnp.float32)
    N = pts.shape[0]
    n_pad = _round_up(N, 8)
    if n_pad != N:
        pts = jnp.pad(pts, ((0, n_pad - N), (0, 0)))
    nc = n_pad // 8
    pts_packed = jnp.transpose(pts).reshape(3, 8, nc)         # sublane-packed coords
    return pl.pallas_call(
        functools.partial(_fps_kernel, n_valid=N),
        out_shape=jax.ShapeDtypeStruct((num_samples,), jnp.int32),
        in_specs=[pl.BlockSpec(memory_space=pltpu.MemorySpace.VMEM)],
        out_specs=pl.BlockSpec(memory_space=pltpu.MemorySpace.SMEM),
    )(pts_packed)


# -----------------------------------------------------------------------------
# PCA normals for the downsampled points (plain JAX: tiny, next to top_k/eigh)
# -----------------------------------------------------------------------------
def compute_normals_jax(down_xyz, k):
    x = down_xyz.astype(jnp.float32)                          # (S, 3), S small
    # Tiny (S, S) pairwise sq-distance in plain XLA (removes a kernel launch).
    d2 = jnp.sum((x[:, None, :] - x[None, :, :]) ** 2, axis=-1)
    _, idx = lax.top_k(-d2, k + 1)                            # self + k nearest
    nbrs = x[idx[:, 1:]]                                      # (S, k, 3)
    centered = nbrs - jnp.mean(nbrs, axis=1, keepdims=True)
    cov = jnp.einsum("skc,skd->scd", centered, centered) / (k - 1)
    # TODO(synk): 3x3 symmetric eigendecomposition has no Pallas equivalent;
    # jnp.linalg.eigh (eigenvector sign ambiguity as in numpy).
    _, eigvecs = jnp.linalg.eigh(cov)
    normals = eigvecs[:, :, 0]
    return (normals / (jnp.linalg.norm(normals, axis=1, keepdims=True) + 1e-8)
            ).astype(jnp.float32)


# -----------------------------------------------------------------------------
# Kernel 2: fused seg head + nearest-neighbor label propagation.
#   Per tile of N points: recompute the tiny per-point MLP + softmax for the S
#   downsampled points (bf16 MXU, f32 accum), find the nearest downsampled
#   point via ||b||^2 - 2 a.b (MXU), gather its class probabilities with a
#   one-hot matmul, and write a lane-dense (tm, 128) probability block.
#   No (N, S) distance matrix or intermediate (S, C) prob array hits HBM.
#
# TODO(synk): `get_model` (PointNet++ sem-seg backbone) is not defined in the
# reference; replaced by a shared 1x1-conv MLP head (9->64->128->C) with the
# same per-point (S, 9) -> (S, num_classes) interface.
# -----------------------------------------------------------------------------
def _seg_propagate_kernel(pos_ref, bt_ref, bsq_ref, feat_ref,
                          w1_ref, b1_ref, w2_ref, b2_ref, w3_ref, b3_ref,
                          out_ref, *, num_classes):
    # ---- seg head on the S downsampled points (tiny; recomputed per tile so
    #      the grid axis stays safely "parallel" across TensorCores) ----
    xf = feat_ref[...].astype(jnp.bfloat16)                   # (S, 9)
    h = jnp.dot(xf, w1_ref[...], preferred_element_type=jnp.float32) + b1_ref[...]
    h = jnp.maximum(h, 0.0)
    h = jnp.dot(h.astype(jnp.bfloat16), w2_ref[...],
                preferred_element_type=jnp.float32) + b2_ref[...]
    h = jnp.maximum(h, 0.0)
    logits = jnp.dot(h.astype(jnp.bfloat16), w3_ref[...],
                     preferred_element_type=jnp.float32) + b3_ref[...]
    lane_c = lax.broadcasted_iota(jnp.int32, logits.shape, 1)
    logits = jnp.where(lane_c < num_classes, logits, -1e30)   # mask padded classes
    m = jnp.max(logits, axis=1, keepdims=True)
    e = jnp.exp(logits - m)
    # Exact division (not approx reciprocal) so the returned probabilities stay
    # calibrated (sum to 1), per correctness review.
    probs = e / jnp.sum(e, axis=1, keepdims=True)             # (S, 128) f32

    # ---- nearest downsampled point for this tile of original points ----
    a = pos_ref[...]                                          # (tm, 3)
    bt = bt_ref[...]                                          # (3, S)
    S = bt.shape[1]
    # ||b||^2 - 2 a.b has the same argmin over b as the true squared distance;
    # the MXU does the heavy lifting. ||b||^2 is hoisted to the wrapper.
    # TODO(synk): fp tie-breaking may differ from torch.cdist on exact ties.
    ab = jnp.dot(a, bt, preferred_element_type=jnp.float32)   # (tm, S) MXU
    d = bsq_ref[...] - 2.0 * ab
    rowmin = jnp.min(d, axis=1, keepdims=True)
    lane_s = lax.broadcasted_iota(jnp.int32, d.shape, 1)
    near = jnp.min(jnp.where(d == rowmin, lane_s, S), axis=1, keepdims=True)
    onehot = (lane_s == near).astype(jnp.float32)             # one 1 per row
    # One-hot gather of the per-class probabilities (MXU), lane-dense store.
    out_ref[...] = jnp.dot(onehot, probs, preferred_element_type=jnp.float32)


def _choose_tile(n, tile_m):
    tm = min(tile_m, _round_up(n, 8))
    # Ensure >= 2 grid steps when possible so both v7x TensorCores get work.
    half = _round_up(-(-n // 2), 8)
    if 8 <= half < tm:
        tm = half
    return max(tm, 8)


def seg_propagate(positions, down_xyz, point_features, params, num_classes, *,
                  tile_m=1024):
    N = positions.shape[0]
    S = down_xyz.shape[0]
    cp = max(128, _round_up(num_classes, 128))                # lane-dense class dim

    w1 = params["w1"].astype(jnp.bfloat16)
    b1 = params["b1"].astype(jnp.float32)
    w2 = params["w2"].astype(jnp.bfloat16)
    b2 = params["b2"].astype(jnp.float32)
    w3 = jnp.pad(params["w3"], ((0, 0), (0, cp - num_classes))).astype(jnp.bfloat16)
    b3 = jnp.pad(params["b3"], ((0, 0), (0, cp - num_classes))).astype(jnp.float32)

    tm = _choose_tile(N, tile_m)
    n_pad = _round_up(N, tm)
    pos = positions.astype(jnp.float32)
    if n_pad != N:
        pos = jnp.pad(pos, ((0, n_pad - N), (0, 0)))
    bt = jnp.transpose(down_xyz.astype(jnp.float32))          # (3, S)
    bsq = jnp.sum(bt * bt, axis=0, keepdims=True)             # (1, S), hoisted
    feat = point_features.astype(jnp.float32)                 # (S, 9)

    const2 = lambda i: (0, 0)
    feats_pad = pl.pallas_call(
        functools.partial(_seg_propagate_kernel, num_classes=num_classes),
        out_shape=jax.ShapeDtypeStruct((n_pad, cp), jnp.float32),
        grid=(n_pad // tm,),
        in_specs=[pl.BlockSpec((tm, 3), lambda i: (i, 0)),
                  pl.BlockSpec(bt.shape, const2),
                  pl.BlockSpec(bsq.shape, const2),
                  pl.BlockSpec(feat.shape, const2),
                  pl.BlockSpec(w1.shape, const2),
                  pl.BlockSpec(b1.shape, const2),
                  pl.BlockSpec(w2.shape, const2),
                  pl.BlockSpec(b2.shape, const2),
                  pl.BlockSpec(w3.shape, const2),
                  pl.BlockSpec(b3.shape, const2)],
        out_specs=pl.BlockSpec((tm, cp), lambda i: (i, 0)),
        compiler_params=pltpu.CompilerParams(dimension_semantics=("parallel",)),
    )(pos, bt, bsq, feat, w1, b1, w2, b2, w3, b3)
    return feats_pad[:N]                                      # (N, cp) padded probs


# -----------------------------------------------------------------------------
# Parameters (deterministic, synthetic)
# -----------------------------------------------------------------------------
def init_params(key, num_classes, in_dim=9, h1=64, h2=128):
    k1, k2, k3 = jax.random.split(key, 3)
    return {
        "w1": 0.1 * jax.random.normal(k1, (in_dim, h1), jnp.float32),
        "b1": jnp.zeros((1, h1), jnp.float32),
        "w2": 0.1 * jax.random.normal(k2, (h1, h2), jnp.float32),
        "b2": jnp.zeros((1, h2), jnp.float32),
        "w3": 0.1 * jax.random.normal(k3, (h2, num_classes), jnp.float32),
        "b3": jnp.zeros((1, num_classes), jnp.float32),
    }


# -----------------------------------------------------------------------------
# Full forward pass (mirrors PointNetSegmenter.forward)
# -----------------------------------------------------------------------------
def pointnet_segmenter_forward(gaussian_positions, gaussian_colors, params, *,
                               num_sample_points=64, knn_k=8, num_classes=13):
    N_total = gaussian_positions.shape[0]
    if N_total < num_sample_points:
        raise ValueError("Not enough gaussians to sample from.")

    sample_idx = farthest_point_sample(gaussian_positions, num_sample_points)  # (S,)
    down_xyz = gaussian_positions[sample_idx].astype(jnp.float32)               # (S, 3)
    down_rgb = gaussian_colors[sample_idx].astype(jnp.float32)                  # (S, 3)
    down_normals = compute_normals_jax(down_xyz, knn_k)                         # (S, 3)

    point_features = jnp.concatenate([down_xyz, down_rgb, down_normals], axis=1)

    # Fused: seg head + cdist-argmin + prob gather in one kernel, lane-dense out.
    feats_pad = seg_propagate(gaussian_positions, down_xyz, point_features,
                              params, num_classes)            # (N, 128)
    semantic_features = feats_pad[:, :num_classes]            # (N, C) softmax probs
    # argmax(softmax(pred)) == argmax(pred); cheap per-point argmax in XLA
    # avoids a narrow masked (tm, 1) store inside the kernel.
    semantic_labels = jnp.argmax(semantic_features, axis=1).astype(jnp.int32)
    return semantic_features, semantic_labels


if __name__ == "__main__":
    key = jax.random.PRNGKey(0)
    kp, kx, kc = jax.random.split(key, 3)

    N_total = 256          # number of gaussians
    num_sample_points = 64
    knn_k = 8
    num_classes = 13

    gaussian_positions = jax.random.normal(kx, (N_total, 3), jnp.float32)
    gaussian_colors = jax.random.uniform(kc, (N_total, 3), jnp.float32)
    params = init_params(kp, num_classes)

    feats, labels = pointnet_segmenter_forward(
        gaussian_positions, gaussian_colors, params,
        num_sample_points=num_sample_points, knn_k=knn_k,
        num_classes=num_classes)
    jax.block_until_ready((feats, labels))

    assert feats.shape == (N_total, num_classes)
    assert labels.shape == (N_total,)
    assert feats.dtype == jnp.float32 and labels.dtype == jnp.int32
    assert bool(jnp.all(labels >= 0)) and bool(jnp.all(labels < num_classes))
    assert bool(jnp.all(jnp.isfinite(feats)))
    print("KERNEL_OK")
</pallas_src>

<mosaic_0001>
module attributes {stable_mosaic.version = 11 : i64} {
  func.func @_fps_kernel(%arg0: memref<3x8x32xf32, #tpu.memory_space<vmem>>, %arg1: memref<64xi32, #tpu.memory_space<smem>>) attributes {dimension_semantics = [], scalar_prefetch = 0 : i64, scratch_operands = 0 : i64, tpu.core_type = #tpu.core_type<tc>} {
    %c0 = arith.constant 0 : index
    %c0_0 = arith.constant 0 : index
    %c0_1 = arith.constant 0 : index
    %0 = vector.load %arg0[%c0, %c0_0, %c0_1] : memref<3x8x32xf32, #tpu.memory_space<vmem>>, vector<1x8x32xf32>
    %1 = vector.shape_cast %0 : vector<1x8x32xf32> to vector<8x32xf32>
    %c1 = arith.constant 1 : index
    %c0_2 = arith.constant 0 : index
    %c0_3 = arith.constant 0 : index
    %2 = vector.load %arg0[%c1, %c0_2, %c0_3] : memref<3x8x32xf32, #tpu.memory_space<vmem>>, vector<1x8x32xf32>
    %3 = vector.shape_cast %2 : vector<1x8x32xf32> to vector<8x32xf32>
    %c2 = arith.constant 2 : index
    %c0_4 = arith.constant 0 : index
    %c0_5 = arith.constant 0 : index
    %4 = vector.load %arg0[%c2, %c0_4, %c0_5] : memref<3x8x32xf32, #tpu.memory_space<vmem>>, vector<1x8x32xf32>
    %5 = vector.shape_cast %4 : vector<1x8x32xf32> to vector<8x32xf32>
    %6 = tpu.iota {dimensions = array<i32: 0>} : vector<8x32xi32>
    %7 = tpu.iota {dimensions = array<i32: 1>} : vector<8x32xi32>
    %c32_i32 = arith.constant 32 : i32
    %8 = vector.broadcast %c32_i32 : i32 to vector<8x32xi32>
    %9 = arith.muli %6, %8 : vector<8x32xi32>
    %10 = arith.addi %9, %7 : vector<8x32xi32>
    %c256_i32 = arith.constant 256 : i32
    %11 = vector.broadcast %c256_i32 : i32 to vector<8x32xi32>
    %12 = arith.cmpi slt, %10, %11 : vector<8x32xi32>
    %cst = arith.constant 1.000000e+10 : f32
    %cst_6 = arith.constant 0.000000e+00 : f32
    %13 = vector.broadcast %cst : f32 to vector<8x32xf32>
    %14 = vector.broadcast %cst_6 : f32 to vector<8x32xf32>
    %15 = arith.select %12, %13, %14 : vector<8x32xi1>, vector<8x32xf32>
    %c0_i32 = arith.constant 0 : i32
    %c0_i32_7 = arith.constant 0 : i32
    %c64_i32 = arith.constant 64 : i32
    %16 = arith.addi %c0_i32_7, %c64_i32 : i32
    %c1_i32 = arith.constant 1 : i32
    %17:2 = scf.for %arg2 = %c0_i32_7 to %16 step %c1_i32 iter_args(%arg3 = %15, %arg4 = %c0_i32) -> (vector<8x32xf32>, i32)  : i32 {
      %18 = arith.index_cast %arg2 : i32 to index
      %19 = memref.load %arg1[%18] : memref<64xi32, #tpu.memory_space<smem>>
      memref.store %arg4, %arg1[%18] : memref<64xi32, #tpu.memory_space<smem>>
      %20 = vector.broadcast %arg4 : i32 to vector<8x32xi32>
      %21 = arith.cmpi eq, %10, %20 : vector<8x32xi32>
      %cst_9 = arith.constant 0.000000e+00 : f32
      %22 = vector.broadcast %cst_9 : f32 to vector<8x32xf32>
      %23 = arith.select %21, %1, %22 : vector<8x32xi1>, vector<8x32xf32>
      %24 = vector.shape_cast %23 : vector<8x32xf32> to vector<1x8x32xf32>
      %cst_10 = arith.constant dense<0.000000e+00> : vector<1xf32>
      %25 = vector.multi_reduction <add>, %24, %cst_10 [1, 2] : vector<1x8x32xf32> to vector<1xf32>
      %26 = vector.shape_cast %25 : vector<1xf32> to vector<1x1x1xf32>
      %27 = vector.extract %26[0, 0, 0] : f32 from vector<1x1x1xf32>
      %cst_11 = arith.constant 0.000000e+00 : f32
      %28 = vector.broadcast %cst_11 : f32 to vector<8x32xf32>
      %29 = arith.select %21, %3, %28 : vector<8x32xi1>, vector<8x32xf32>
      %30 = vector.shape_cast %29 : vector<8x32xf32> to vector<1x8x32xf32>
      %cst_12 = arith.constant dense<0.000000e+00> : vector<1xf32>
      %31 = vector.multi_reduction <add>, %30, %cst_12 [1, 2] : vector<1x8x32xf32> to vector<1xf32>
      %32 = vector.shape_cast %31 : vector<1xf32> to vector<1x1x1xf32>
      %33 = vector.extract %32[0, 0, 0] : f32 from vector<1x1x1xf32>
      %cst_13 = arith.constant 0.000000e+00 : f32
      %34 = vector.broadcast %cst_13 : f32 to vector<8x32xf32>
      %35 = arith.select %21, %5, %34 : vector<8x32xi1>, vector<8x32xf32>
      %36 = vector.shape_cast %35 : vector<8x32xf32> to vector<1x8x32xf32>
      %cst_14 = arith.constant dense<0.000000e+00> : vector<1xf32>
      %37 = vector.multi_reduction <add>, %36, %cst_14 [1, 2] : vector<1x8x32xf32> to vector<1xf32>
      %38 = vector.shape_cast %37 : vector<1xf32> to vector<1x1x1xf32>
      %39 = vector.extract %38[0, 0, 0] : f32 from vector<1x1x1xf32>
      %40 = vector.broadcast %27 : f32 to vector<8x32xf32>
      %41 = arith.subf %1, %40 : vector<8x32xf32>
      %42 = vector.broadcast %33 : f32 to vector<8x32xf32>
      %43 = arith.subf %3, %42 : vector<8x32xf32>
      %44 = vector.broadcast %39 : f32 to vector<8x32xf32>
      %45 = arith.subf %5, %44 : vector<8x32xf32>
      %46 = arith.mulf %41, %41 : vector<8x32xf32>
      %47 = arith.mulf %43, %43 : vector<8x32xf32>
      %48 = arith.addf %46, %47 : vector<8x32xf32>
      %49 = arith.mulf %45, %45 : vector<8x32xf32>
      %50 = arith.addf %48, %49 : vector<8x32xf32>
      %51 = arith.minimumf %arg3, %50 : vector<8x32xf32>
      %52 = tpu.bitcast %51 : vector<8x32xf32> -> vector<8x32xi32>
      %c-256_i32 = arith.constant -256 : i32
      %53 = vector.broadcast %c-256_i32 : i32 to vector<8x32xi32>
      %54 = arith.andi %52, %53 : vector<8x32xi32>
      %c255_i32 = arith.constant 255 : i32
      %55 = vector.broadcast %c255_i32 : i32 to vector<8x32xi32>
      %56 = arith.subi %55, %10 : vector<8x32xi32>
      %57 = arith.ori %54, %56 : vector<8x32xi32>
      %58 = vector.shape_cast %57 : vector<8x32xi32> to vector<1x8x32xi32>
      %cst_15 = arith.constant dense<-2147483648> : vector<1xi32>
      %59 = vector.multi_reduction <maxsi>, %58, %cst_15 [1, 2] : vector<1x8x32xi32> to vector<1xi32>
      %60 = vector.shape_cast %59 : vector<1xi32> to vector<1x1x1xi32>
      %61 = vector.extract %60[0, 0, 0] : i32 from vector<1x1x1xi32>
      %c255_i32_16 = arith.constant 255 : i32
      %62 = arith.andi %61, %c255_i32_16 : i32
      %c255_i32_17 = arith.constant 255 : i32
      %63 = arith.subi %c255_i32_17, %62 : i32
      scf.yield %51, %63 : vector<8x32xf32>, i32
    }
    %c64_i32_8 = arith.constant 64 : i32
    return
  }
}

</mosaic_0001>

<llo_original>
// kernel: tpu_custom_call.1
$region0: #{tpu_custom_call.1}
  #allocation0 [shape = 'u32[]', space=smem, size = 0x4, offset = 0x4, fixed_abs, tag = 'smem constant byte address 0x4 - core index']
  #allocation1 [shape = 'u32[144,128]{1,0:T(1,128)}', space=vmem, size = 0x12000, scoped, tag = 'internal scratch']
  %s0 = inlined_call_operand.hbm [shape: f32[3,8,32], index: 0, kind: input, shape index: {}]
  %s1 = inlined_call_operand.hbm [shape: s32[64], index: 1, kind: output, shape index: {}]
  %s2 = sld [smem:[#allocation0]]
  $region25: #{tpu_custom_call.1} parent=0
    _
  %s4 = ssub.s32 1, %s2
  %s5 = scalar_select 0, %s4, %s2
  $region1: #{tpu_custom_call.1} parent=0
    #allocation2 [shape = 'u8[12288]{0}', space=vmem, size = 0x3000, scoped, tag = 'input window, operand 0, single buffered']
    #allocation3 [shape = 's32[1]{0}', space=sflag, size = 0x4, scoped, tag = 'scoped memory for tpu_custom_call.1']
    #allocation4 [shape = 's32[1]{0}', space=sflag, size = 0x4, scoped, tag = 'scoped memory for tpu_custom_call.1']
    #allocation5 [shape = 'u8[512]{0}', space=smem, size = 0x200, scoped, tag = 'output window, operand 0, single buffered']
    %6 = vsyncpa [#allocation3], 0
    %7 = vsyncpa [#allocation4], 0
    // Predicated region
    $region2: #{tpu_custom_call.1} parent=1 // pred_check
      _
    $region3: #{tpu_custom_call.1} parent=1 // pred_check_branch
      %9 = sbr.rel (0) target = $region5
    $region4: #{tpu_custom_call.1} parent=1 // pred_region
      %s11 = ssub.s32 384, 384
      %12 = vsyncadd [#allocation3], %s11
      %s13 = sshll.u32 [#allocation2], 4
      %s14 = int_to_ptr.vmem [resolvable:$true] %s13
      %19 = dma.hbm_to_vmem [thread:$0]  %s0, 384, %s14, [#allocation3], 128, 128, 8
    $region5: #{tpu_custom_call.1} parent=1 // pred_fallthru
      _
    // Predicated region
    $region6: #{tpu_custom_call.1} parent=1 // pred_check
      _
    $region7: #{tpu_custom_call.1} parent=1 // pred_check_branch
      %21 = sbr.rel (0) target = $region9
    $region8: #{tpu_custom_call.1} parent=1 // pred_region
      %22 = dma.done [#allocation3], 384
    $region9: #{tpu_custom_call.1} parent=1 // pred_fallthru
      _
    %v23 = vld [vmem:[#allocation2] sm:$0xff]
    %s24 = scalar_lea.vmem [#allocation2], 8
    %v25 = vld [vmem:[%s24] sm:$0xff]
    %s26 = scalar_lea.vmem [#allocation2], 16
    %v27 = vld [vmem:[%s26] sm:$0xff]
    %v28 = vlaneseq
    %v29 = vshrl.u32 %v28, 7
    %v30 = vlaneseq
    %v31 = vand.u32 %v30, 127
    %v32 = vmul.u32 %v29, 32
    %v33 = vadd.s32 %v32, %v31
    %vm34 = vcmp.lt.s32.totalorder %v33, 256
    %v35 = vsel %vm34, 1e+10, 0.0
    loop: start=0, step=1, limit=64
    $region10: #{tpu_custom_call.1} parent=1 // loop_pre_header
      _
    $region11: #{tpu_custom_call.1} parent=1 // loop_header
      %s37 = sphi 0, %s41
      %p38 = scmp.ge.s32.totalorder %s37, 64
      %v42 = vphi %v35, %v93
      %s43 = sphi 0, %s124
    $region12: #{tpu_custom_call.1} parent=1 // loop_header_branch
      %40 = sbr.rel (%p38) target = $region16
    $region13: #{tpu_custom_call.1} parent=1 // loop_body
      %s44 = scalar_lea.smem [#allocation5], %s37
      %45 = sst [smem:[%s44]] %s43
      %v46 = vstv %s43
      %vm47 = vcmp.eq.s32.totalorder %v33, %v46
      %v48 = vsel %vm47, %v23, 0.0
      %vm49 = vcmask 261120
      %v50 = vsel %vm49, %v48, 0.0
      %51 = vadd.xlane.f32.xlu0 %v50
      %v52 = vpop.xlane.xlu0 %51
      %v53 = vrot.slane %v52, 4
      %v54 = vadd.f32 %v52, %v53
      %v55 = vrot.slane %v54, 2
      %v56 = vadd.f32 %v54, %v55
      %v57 = vrot.slane %v56, 1
      %v58 = vadd.f32 %v56, %v57
      %s59 = vtos %v58
      %v60 = vsel %vm47, %v25, 0.0
      %v61 = vsel %vm49, %v60, 0.0
      %62 = vadd.xlane.f32.xlu0 %v61
      %v63 = vpop.xlane.xlu0 %62
      %v64 = vrot.slane %v63, 4
      %v65 = vadd.f32 %v63, %v64
      %v66 = vrot.slane %v65, 2
      %v67 = vadd.f32 %v65, %v66
      %v68 = vrot.slane %v67, 1
      %v69 = vadd.f32 %v67, %v68
      %s70 = vtos %v69
      %v71 = vsel %vm47, %v27, 0.0
      %v72 = vsel %vm49, %v71, 0.0
      %73 = vadd.xlane.f32.xlu0 %v72
      %v74 = vpop.xlane.xlu0 %73
      %v75 = vrot.slane %v74, 4
      %v76 = vadd.f32 %v74, %v75
      %v77 = vrot.slane %v76, 2
      %v78 = vadd.f32 %v76, %v77
      %v79 = vrot.slane %v78, 1
      %v80 = vadd.f32 %v78, %v79
      %s81 = vtos %v80
      %v82 = vstv %s59
      %v83 = vsub.f32 %v23, %v82
      %v84 = vstv %s70
      %v85 = vsub.f32 %v25, %v84
      %v86 = vstv %s81
      %v87 = vsub.f32 %v27, %v86
      %v88 = vmul.f32 %v83, %v83
      %v89 = vmul.f32 %v85, %v85
      %v90 = vadd.f32 %v88, %v89
      %v91 = vmul.f32 %v87, %v87
      %v92 = vadd.f32 %v90, %v91
      %v93 = vmin.f32 %v42, %v92
      %v95 = vand.u32 %v93, 4294967040
      %v96 = vsub.s32 255, %v33
      %v97 = vor.u32 %v95, %v96
      %v98 = vsel %vm49, %v97, 2147483648
      %v99 = vand.u32 %v98, 65535
      %v100 = vshra.s32 %v98, 16
      %v101 = vcvt.s32.f32 %v99
      %v102 = vcvt.s32.f32 %v100
      %103 = vmax.xlane.f32.xlu0 %v102
      %v104 = vpop.xlane.xlu0 %103
      %vm105 = vcmp.eq.f32.partialorder %v102, %v104
      %v106 = vsel %vm105, %v101, -inf
      %107 = vmax.xlane.f32.xlu0 %v106
      %v108 = vpop.xlane.xlu0 %107
      %v109 = vcvt.f32.s32 %v108
      %v110 = vcvt.f32.s32 %v104
      %v111 = vshll.u32 %v110, 16
      %v112 = vadd.s32 %v111, %v109
      %v113 = vrot.slane %v112, 4
      %vm114 = vcmp.gt.s32.totalorder %v112, %v113
      %v115 = vsel %vm114, %v112, %v113
      %v116 = vrot.slane %v115, 2
      %vm117 = vcmp.gt.s32.totalorder %v115, %v116
      %v118 = vsel %vm117, %v115, %v116
      %v119 = vrot.slane %v118, 1
      %vm120 = vcmp.gt.s32.totalorder %v118, %v119
      %v121 = vsel %vm120, %v118, %v119
      %s122 = vtos %v121
      %s123 = sand.u32 %s122, 255
      %s124 = ssub.s32 255, %s123
    $region14: #{tpu_custom_call.1} parent=1 // loop_footer
      %s41 = sadd.s32 1, %s37
    $region15: #{tpu_custom_call.1} parent=1 // loop_footer_branch
      %36 = sbr.rel target = $region11
    $region16: #{tpu_custom_call.1} parent=1 // loop_exit
      _
    // Predicated region
    $region17: #{tpu_custom_call.1} parent=1 // pred_check
      _
    $region18: #{tpu_custom_call.1} parent=1 // pred_check_branch
      %126 = sbr.rel (0) target = $region20
    $region19: #{tpu_custom_call.1} parent=1 // pred_region
      %s128 = ssub.s32 16, 16
      %129 = vsyncadd [#allocation4], %s128
      %132 = dma.smem_to_hbm [#allocation5], 16, %s1, [#allocation4]
    $region20: #{tpu_custom_call.1} parent=1 // pred_fallthru
      _
    // Predicated region
    $region21: #{tpu_custom_call.1} parent=1 // pred_check
      _
    $region22: #{tpu_custom_call.1} parent=1 // pred_check_branch
      %134 = sbr.rel (0) target = $region24
    $region23: #{tpu_custom_call.1} parent=1 // pred_region
      %135 = dma.done [#allocation4], 16
    $region24: #{tpu_custom_call.1} parent=1 // pred_fallthru
      _
    %136 = sfence
    %137 = vsyncpa [#allocation3], 1
    %138 = vsyncpa [#allocation4], 1

</llo_original>
